<compile_context>
chip_gen: v5e
topology: v5e:2x2
jax: 0.10.0
libtpu: 0.0.40
codegen_flags: <defaults>
</compile_context>

<pallas_src>
import math
import jax
import jax.numpy as jnp
from jax.experimental import pallas as pl
from jax.experimental.pallas import tpu as pltpu

_INV_SQRT2 = 1.0 / math.sqrt(2.0)


# --------------------------------------------------------------------------- #
# Kernel
# --------------------------------------------------------------------------- #
def _make_kernel(approximate_gelu: bool):
    def kernel(x_ref, w1_ref, b1_ref, w2_ref, b2_ref, o_ref):
        # fc1: bf16 x bf16 -> f32 accumulation on the MXU
        h = jnp.dot(x_ref[...], w1_ref[...], preferred_element_type=jnp.float32)
        h = h + b1_ref[...]                       # f32 bias, broadcast over rows
        if approximate_gelu:
            # tanh GELU: transcendental goes to the EUP slot (free vs. VALU).
            h = jax.nn.gelu(h, approximate=True)
        else:
            # exact erf GELU (matches torch nn.GELU default bit-for-bit in f32)
            h = 0.5 * h * (1.0 + jax.lax.erf(h * _INV_SQRT2))
        # fc2: cast activations to the weight dtype (bf16) for the MXU
        y = jnp.dot(h.astype(w2_ref.dtype), w2_ref[...],
                    preferred_element_type=jnp.float32)
        y = y + b2_ref[...]
        o_ref[...] = y.astype(o_ref.dtype)
    return kernel


# --------------------------------------------------------------------------- #
# Helpers
# --------------------------------------------------------------------------- #
def _round_up(n, m):
    return ((n + m - 1) // m) * m


def _vmem_capacity_bytes():
    try:
        return int(pltpu.get_tpu_info().vmem_capacity_bytes)
    except Exception:
        return 64 << 20  # conservative (v7x per-TensorCore)


def _pick_row_tile(M, max_tile):
    """Row tile: multiple of 16 (bf16 sublane pairs), minimal padding."""
    m16 = _round_up(max(M, 1), 16)
    if m16 <= 128:
        return m16
    cands = [t for t in (512, 256, 128) if t <= max_tile] or [128]
    # minimize padded rows; prefer the larger tile on ties
    return min(cands, key=lambda t: (_round_up(M, t) - M, -t))


def _build_mlp_call(*, tm, Mp, Din, H, Dout, out_dtype, vmem_limit,
                    approximate_gelu, single_buffer_weights, w_itemsize,
                    out_itemsize):
    if single_buffer_weights:
        # Grid-invariant operands: never re-DMA'd, one VMEM buffer is enough.
        inv = lambda shape: pl.BlockSpec(shape, lambda i: (0, 0),
                                         pipeline_mode=pl.Buffered(1))
    else:
        inv = lambda shape: pl.BlockSpec(shape, lambda i: (0, 0))

    cost = pl.CostEstimate(
        flops=2 * Mp * (Din * H + H * Dout),
        transcendentals=Mp * H,
        bytes_accessed=Mp * Din * w_itemsize + Mp * Dout * out_itemsize
        + (Din * H + H * Dout) * w_itemsize + (H + Dout) * 4,
    )

    return pl.pallas_call(
        _make_kernel(approximate_gelu),
        out_shape=jax.ShapeDtypeStruct((Mp, Dout), out_dtype),
        grid_spec=pl.GridSpec(
            grid=(Mp // tm,),
            in_specs=[
                pl.BlockSpec((tm, Din), lambda i: (i, 0)),   # x rows (bf16)
                inv((Din, H)),                               # W1_eff (bf16)
                inv((1, H)),                                 # b1 (f32)
                inv((H, Dout)),                              # W2_eff (bf16)
                inv((1, Dout)),                              # b2 (f32)
            ],
            out_specs=pl.BlockSpec((tm, Dout), lambda i: (i, 0)),
        ),
        compiler_params=pltpu.CompilerParams(
            dimension_semantics=("parallel",),
            vmem_limit_bytes=vmem_limit,
        ),
        cost_estimate=cost,
    )


# --------------------------------------------------------------------------- #
# Public API
# --------------------------------------------------------------------------- #
def prepare_params(params, *, compute_dtype=jnp.bfloat16):
    """Fold the parallel low-rank branches into the dense weights and cast to
    the MXU compute dtype.  Call ONCE per parameter set (hoisted out of the
    per-forward path)."""
    w1_eff = params["w1"] + params["a1"] @ params["c1"]
    w2_eff = params["w2"] + params["a2"] @ params["c2"]
    return {
        "w1": w1_eff.astype(compute_dtype),
        "b1": params["b1"].astype(jnp.float32).reshape(1, -1),
        "w2": w2_eff.astype(compute_dtype),
        "b2": params["b2"].astype(jnp.float32).reshape(1, -1),
    }


def mlp_spt_parallel(x, prepared, *, out_dtype=jnp.bfloat16,
                     approximate_gelu=True):
    """x: (B, N, Din), ideally already bf16.  Returns (B, N, Dout) in out_dtype.

    Eval-mode forward of the ViT MLP: y = GELU(x @ W1 + b1) @ W2 + b2, with the
    low-rank branches already folded into W1/W2 by prepare_params().
    """
    B, N, Din = x.shape
    M = B * N
    w1, b1, w2, b2 = prepared["w1"], prepared["b1"], prepared["w2"], prepared["b2"]
    H, Dout = w1.shape[1], w2.shape[1]
    assert w1.shape[0] == Din and w2.shape[0] == H

    # ---- hardware-aware tiling / VMEM budget ----
    vmem_cap = _vmem_capacity_bytes()
    max_tile = 512 if vmem_cap >= (100 << 20) else 256     # 512 on v5e/v6e, 256 on v7x
    tm = _pick_row_tile(M, max_tile)
    Mp = _round_up(M, tm)

    w_itemsize = jnp.dtype(w1.dtype).itemsize
    out_itemsize = jnp.dtype(out_dtype).itemsize
    # budget with double-buffered weights so the fallback path also fits
    weight_bytes = 2 * ((Din * H + H * Dout) * w_itemsize + (H + Dout) * 4)
    io_bytes = 2 * tm * Din * w_itemsize + 2 * tm * Dout * out_itemsize
    interm_bytes = tm * H * 4
    est = int(1.25 * (weight_bytes + io_bytes + interm_bytes)) + (4 << 20)
    vmem_limit = min(max(est, 32 << 20), int(0.8 * vmem_cap))

    # ---- activations: cast only if the caller did not already supply bf16 ----
    x2d = x.reshape(M, Din)
    if x2d.dtype != w1.dtype:
        x2d = x2d.astype(w1.dtype)
    if Mp != M:
        x2d = jnp.pad(x2d, ((0, Mp - M), (0, 0)))   # padded rows are discarded

    common = dict(tm=tm, Mp=Mp, Din=Din, H=H, Dout=Dout, out_dtype=out_dtype,
                  vmem_limit=vmem_limit, approximate_gelu=approximate_gelu,
                  w_itemsize=w_itemsize, out_itemsize=out_itemsize)
    args = (x2d, w1, b1, w2, b2)
    try:
        out2d = _build_mlp_call(single_buffer_weights=True, **common)(*args)
    except Exception:
        # fallback: default double-buffered weight tiles
        out2d = _build_mlp_call(single_buffer_weights=False, **common)(*args)

    return out2d[:M].reshape(B, N, Dout)


# --------------------------------------------------------------------------- #
# Synthetic parameters + pure-JAX reference
# --------------------------------------------------------------------------- #
def make_params(key, in_features, hidden_features, out_features, low_rank_dim):
    """Deterministic synthetic parameters (shapes match the torch module; random
    values so the low-rank branches are actually exercised)."""
    ks = jax.random.split(key, 8)
    scale = lambda fan_in: 1.0 / math.sqrt(fan_in)
    return {
        "w1": jax.random.uniform(ks[0], (in_features, hidden_features),
                                 jnp.float32, -scale(in_features), scale(in_features)),
        "b1": jax.random.uniform(ks[1], (1, hidden_features),
                                 jnp.float32, -scale(in_features), scale(in_features)),
        "a1": jax.random.uniform(ks[2], (in_features, low_rank_dim),
                                 jnp.float32, -scale(in_features), scale(in_features)),
        "c1": jax.random.uniform(ks[3], (low_rank_dim, hidden_features),
                                 jnp.float32, -0.05, 0.05),
        "w2": jax.random.uniform(ks[4], (hidden_features, out_features),
                                 jnp.float32, -scale(hidden_features), scale(hidden_features)),
        "b2": jax.random.uniform(ks[5], (1, out_features),
                                 jnp.float32, -scale(hidden_features), scale(hidden_features)),
        "a2": jax.random.uniform(ks[6], (hidden_features, low_rank_dim),
                                 jnp.float32, -scale(hidden_features), scale(hidden_features)),
        "c2": jax.random.uniform(ks[7], (low_rank_dim, out_features),
                                 jnp.float32, -0.05, 0.05),
    }


def reference(x, p):
    """Pure-JAX f32 reference of the torch forward (eval mode, exact-erf GELU)."""
    h = x @ p["w1"] + p["b1"] + (x @ p["a1"]) @ p["c1"]
    h = jax.nn.gelu(h, approximate=False)
    y = h @ p["w2"] + p["b2"] + (h @ p["a2"]) @ p["c2"]
    return y


# --------------------------------------------------------------------------- #
# Demo / self-check
# --------------------------------------------------------------------------- #
if __name__ == "__main__":
    B, N = 2, 8                      # batch, sequence length  -> M = 16 rows
    in_features = 32
    hidden_features = 64
    out_features = 32
    low_rank_dim = 8

    key = jax.random.PRNGKey(0)
    kx, kp = jax.random.split(key)
    x = jax.random.normal(kx, (B, N, in_features), jnp.float32)
    params = make_params(kp, in_features, hidden_features, out_features, low_rank_dim)

    # one-time per-parameter-set preparation (LoRA fold + bf16 cast)
    prepared = prepare_params(params)
    # one-time activation cast at the API boundary (no per-call f32->bf16 pass)
    x_b = x.astype(jnp.bfloat16)

    out = mlp_spt_parallel(x_b, prepared)
    out = jax.block_until_ready(out)

    ref = reference(x.reshape(-1, in_features), params).reshape(B, N, out_features)
    assert out.shape == (B, N, out_features)
    # bf16 matmuls / bf16 output / tanh-GELU vs. the f32 erf reference:
    assert jnp.allclose(out.astype(jnp.float32), ref, atol=5e-2, rtol=5e-2), \
        "mismatch vs reference"

    print("KERNEL_OK")
</pallas_src>

<mosaic_0001>
module attributes {stable_mosaic.version = 11 : i64} {
  func.func @kernel(%arg0: i32, %arg1: memref<16x32xbf16, #tpu.memory_space<vmem>>, %arg2: memref<32x64xbf16, #tpu.memory_space<vmem>>, %arg3: memref<1x64xf32, #tpu.memory_space<vmem>>, %arg4: memref<64x32xbf16, #tpu.memory_space<vmem>>, %arg5: memref<1x32xf32, #tpu.memory_space<vmem>>, %arg6: memref<16x32xbf16, #tpu.memory_space<vmem>>) attributes {dimension_semantics = [#tpu.dimension_semantics<parallel>], iteration_bounds = array<i64: 1>, scalar_prefetch = 0 : i64, scratch_operands = 0 : i64, tpu.core_type = #tpu.core_type<tc>, window_params = [{transform_indices = @transform_0, window_bounds = array<i64: 16, 32>}, {pipeline_mode = #tpu.pipeline_mode<synchronous>, transform_indices = @transform_1, window_bounds = array<i64: 32, 64>}, {pipeline_mode = #tpu.pipeline_mode<synchronous>, transform_indices = @transform_2, window_bounds = array<i64: 1, 64>}, {pipeline_mode = #tpu.pipeline_mode<synchronous>, transform_indices = @transform_3, window_bounds = array<i64: 64, 32>}, {pipeline_mode = #tpu.pipeline_mode<synchronous>, transform_indices = @transform_4, window_bounds = array<i64: 1, 32>}, {transform_indices = @transform_5, window_bounds = array<i64: 16, 32>}]} {
    %c0 = arith.constant 0 : index
    %c0_0 = arith.constant 0 : index
    %0 = vector.load %arg1[%c0, %c0_0] : memref<16x32xbf16, #tpu.memory_space<vmem>>, vector<16x32xbf16>
    %c0_1 = arith.constant 0 : index
    %c0_2 = arith.constant 0 : index
    %1 = vector.load %arg2[%c0_1, %c0_2] : memref<32x64xbf16, #tpu.memory_space<vmem>>, vector<32x64xbf16>
    %cst = arith.constant dense<0.000000e+00> : vector<16x64xf32>
    %2 = tpu.matmul %0, %1, %cst {dimension_numbers = #tpu.dot_dimension_numbers<[1], [0], [0], [1], [0, 0, 1, 1], [], []>} : vector<16x32xbf16>, vector<32x64xbf16>, vector<16x64xf32> -> vector<16x64xf32>
    %c0_3 = arith.constant 0 : index
    %c0_4 = arith.constant 0 : index
    %3 = vector.load %arg3[%c0_3, %c0_4] : memref<1x64xf32, #tpu.memory_space<vmem>>, vector<1x64xf32>
    %4 = vector.broadcast %3 : vector<1x64xf32> to vector<16x64xf32>
    %5 = arith.addf %2, %4 : vector<16x64xf32>
    %6 = arith.mulf %5, %5 : vector<16x64xf32>
    %7 = arith.mulf %5, %6 : vector<16x64xf32>
    %cst_5 = arith.constant 4.471500e-02 : f32
    %8 = vector.broadcast %cst_5 : f32 to vector<16x64xf32>
    %9 = arith.mulf %8, %7 : vector<16x64xf32>
    %10 = arith.addf %5, %9 : vector<16x64xf32>
    %cst_6 = arith.constant 0.797884583 : f32
    %11 = vector.broadcast %cst_6 : f32 to vector<16x64xf32>
    %12 = arith.mulf %11, %10 : vector<16x64xf32>
    %13 = math.tanh %12 : vector<16x64xf32>
    %cst_7 = arith.constant 1.000000e+00 : f32
    %14 = vector.broadcast %cst_7 : f32 to vector<16x64xf32>
    %15 = arith.addf %14, %13 : vector<16x64xf32>
    %cst_8 = arith.constant 5.000000e-01 : f32
    %16 = vector.broadcast %cst_8 : f32 to vector<16x64xf32>
    %17 = arith.mulf %16, %15 : vector<16x64xf32>
    %18 = arith.mulf %5, %17 : vector<16x64xf32>
    %19 = arith.truncf %18 : vector<16x64xf32> to vector<16x64xbf16>
    %c0_9 = arith.constant 0 : index
    %c0_10 = arith.constant 0 : index
    %20 = vector.load %arg4[%c0_9, %c0_10] : memref<64x32xbf16, #tpu.memory_space<vmem>>, vector<64x32xbf16>
    %cst_11 = arith.constant dense<0.000000e+00> : vector<16x32xf32>
    %21 = tpu.matmul %19, %20, %cst_11 {dimension_numbers = #tpu.dot_dimension_numbers<[1], [0], [0], [1], [0, 0, 1, 1], [], []>} : vector<16x64xbf16>, vector<64x32xbf16>, vector<16x32xf32> -> vector<16x32xf32>
    %c0_12 = arith.constant 0 : index
    %c0_13 = arith.constant 0 : index
    %22 = vector.load %arg5[%c0_12, %c0_13] : memref<1x32xf32, #tpu.memory_space<vmem>>, vector<1x32xf32>
    %23 = vector.broadcast %22 : vector<1x32xf32> to vector<16x32xf32>
    %24 = arith.addf %21, %23 : vector<16x32xf32>
    %25 = arith.truncf %24 : vector<16x32xf32> to vector<16x32xbf16>
    %c0_14 = arith.constant 0 : index
    %c0_15 = arith.constant 0 : index
    %26 = vector.load %arg6[%c0_14, %c0_15] : memref<16x32xbf16, #tpu.memory_space<vmem>>, vector<16x32xbf16>
    tpu.vector_store %arg6[%c0_14, %c0_15], %25 {strides = array<i32>} : memref<16x32xbf16, #tpu.memory_space<vmem>>, vector<16x32xbf16>,
    return
  }
  func.func @transform_0(%arg0: i32) -> (i32, i32) {
    %c0_i32 = arith.constant 0 : i32
    %c0_i32_0 = arith.constant 0 : i32
    return %arg0, %c0_i32 : i32, i32
  }
  func.func @transform_1(%arg0: i32) -> (i32, i32) {
    %c0_i32 = arith.constant 0 : i32
    %c0_i32_0 = arith.constant 0 : i32
    %c0_i32_1 = arith.constant 0 : i32
    return %c0_i32, %c0_i32_0 : i32, i32
  }
  func.func @transform_2(%arg0: i32) -> (i32, i32) {
    %c0_i32 = arith.constant 0 : i32
    %c0_i32_0 = arith.constant 0 : i32
    %c0_i32_1 = arith.constant 0 : i32
    return %c0_i32, %c0_i32_0 : i32, i32
  }
  func.func @transform_3(%arg0: i32) -> (i32, i32) {
    %c0_i32 = arith.constant 0 : i32
    %c0_i32_0 = arith.constant 0 : i32
    %c0_i32_1 = arith.constant 0 : i32
    return %c0_i32, %c0_i32_0 : i32, i32
  }
  func.func @transform_4(%arg0: i32) -> (i32, i32) {
    %c0_i32 = arith.constant 0 : i32
    %c0_i32_0 = arith.constant 0 : i32
    %c0_i32_1 = arith.constant 0 : i32
    return %c0_i32, %c0_i32_0 : i32, i32
  }
  func.func @transform_5(%arg0: i32) -> (i32, i32) {
    %c0_i32 = arith.constant 0 : i32
    %c0_i32_0 = arith.constant 0 : i32
    return %arg0, %c0_i32 : i32, i32
  }
}

module attributes {stable_mosaic.version = 11 : i64} {
  func.func @kernel(%arg0: i32, %arg1: memref<16x32xbf16, #tpu.memory_space<vmem>>, %arg2: memref<32x64xbf16, #tpu.memory_space<vmem>>, %arg3: memref<1x64xf32, #tpu.memory_space<vmem>>, %arg4: memref<64x32xbf16, #tpu.memory_space<vmem>>, %arg5: memref<1x32xf32, #tpu.memory_space<vmem>>, %arg6: memref<16x32xbf16, #tpu.memory_space<vmem>>) attributes {dimension_semantics = [#tpu.dimension_semantics<parallel>], iteration_bounds = array<i64: 1>, scalar_prefetch = 0 : i64, scratch_operands = 0 : i64, tpu.core_type = #tpu.core_type<tc>, window_params = [{transform_indices = @transform_0, window_bounds = array<i64: 16, 32>}, {pipeline_mode = #tpu.pipeline_mode<synchronous>, transform_indices = @transform_1, window_bounds = array<i64: 32, 64>}, {pipeline_mode = #tpu.pipeline_mode<synchronous>, transform_indices = @transform_2, window_bounds = array<i64: 1, 64>}, {pipeline_mode = #tpu.pipeline_mode<synchronous>, transform_indices = @transform_3, window_bounds = array<i64: 64, 32>}, {pipeline_mode = #tpu.pipeline_mode<synchronous>, transform_indices = @transform_4, window_bounds = array<i64: 1, 32>}, {transform_indices = @transform_5, window_bounds = array<i64: 16, 32>}]} {
    %c0 = arith.constant 0 : index
    %c0_0 = arith.constant 0 : index
    %0 = vector.load %arg1[%c0, %c0_0] : memref<16x32xbf16, #tpu.memory_space<vmem>>, vector<16x32xbf16>
    %c0_1 = arith.constant 0 : index
    %c0_2 = arith.constant 0 : index
    %1 = vector.load %arg2[%c0_1, %c0_2] : memref<32x64xbf16, #tpu.memory_space<vmem>>, vector<32x64xbf16>
    %cst = arith.constant dense<0.000000e+00> : vector<16x64xf32>
    %2 = tpu.matmul %0, %1, %cst {dimension_numbers = #tpu.dot_dimension_numbers<[1], [0], [0], [1], [0, 0, 1, 1], [], []>} : vector<16x32xbf16>, vector<32x64xbf16>, vector<16x64xf32> -> vector<16x64xf32>
    %c0_3 = arith.constant 0 : index
    %c0_4 = arith.constant 0 : index
    %3 = vector.load %arg3[%c0_3, %c0_4] : memref<1x64xf32, #tpu.memory_space<vmem>>, vector<1x64xf32>
    %4 = vector.broadcast %3 : vector<1x64xf32> to vector<16x64xf32>
    %5 = arith.addf %2, %4 : vector<16x64xf32>
    %6 = arith.mulf %5, %5 : vector<16x64xf32>
    %7 = arith.mulf %5, %6 : vector<16x64xf32>
    %cst_5 = arith.constant 4.471500e-02 : f32
    %8 = vector.broadcast %cst_5 : f32 to vector<16x64xf32>
    %9 = arith.mulf %8, %7 : vector<16x64xf32>
    %10 = arith.addf %5, %9 : vector<16x64xf32>
    %cst_6 = arith.constant 0.797884583 : f32
    %11 = vector.broadcast %cst_6 : f32 to vector<16x64xf32>
    %12 = arith.mulf %11, %10 : vector<16x64xf32>
    %13 = math.tanh %12 : vector<16x64xf32>
    %cst_7 = arith.constant 1.000000e+00 : f32
    %14 = vector.broadcast %cst_7 : f32 to vector<16x64xf32>
    %15 = arith.addf %14, %13 : vector<16x64xf32>
    %cst_8 = arith.constant 5.000000e-01 : f32
    %16 = vector.broadcast %cst_8 : f32 to vector<16x64xf32>
    %17 = arith.mulf %16, %15 : vector<16x64xf32>
    %18 = arith.mulf %5, %17 : vector<16x64xf32>
    %19 = arith.truncf %18 : vector<16x64xf32> to vector<16x64xbf16>
    %c0_9 = arith.constant 0 : index
    %c0_10 = arith.constant 0 : index
    %20 = vector.load %arg4[%c0_9, %c0_10] : memref<64x32xbf16, #tpu.memory_space<vmem>>, vector<64x32xbf16>
    %cst_11 = arith.constant dense<0.000000e+00> : vector<16x32xf32>
    %21 = tpu.matmul %19, %20, %cst_11 {dimension_numbers = #tpu.dot_dimension_numbers<[1], [0], [0], [1], [0, 0, 1, 1], [], []>} : vector<16x64xbf16>, vector<64x32xbf16>, vector<16x32xf32> -> vector<16x32xf32>
    %c0_12 = arith.constant 0 : index
    %c0_13 = arith.constant 0 : index
    %22 = vector.load %arg5[%c0_12, %c0_13] : memref<1x32xf32, #tpu.memory_space<vmem>>, vector<1x32xf32>
    %23 = vector.broadcast %22 : vector<1x32xf32> to vector<16x32xf32>
    %24 = arith.addf %21, %23 : vector<16x32xf32>
    %25 = arith.truncf %24 : vector<16x32xf32> to vector<16x32xbf16>
    %c0_14 = arith.constant 0 : index
    %c0_15 = arith.constant 0 : index
    %26 = vector.load %arg6[%c0_14, %c0_15] : memref<16x32xbf16, #tpu.memory_space<vmem>>, vector<16x32xbf16>
    tpu.vector_store %arg6[%c0_14, %c0_15], %25 {strides = array<i32>} : memref<16x32xbf16, #tpu.memory_space<vmem>>, vector<16x32xbf16>,
    return
  }
  func.func @transform_0(%arg0: i32) -> (i32, i32) {
    %c0_i32 = arith.constant 0 : i32
    %c0_i32_0 = arith.constant 0 : i32
    return %arg0, %c0_i32 : i32, i32
  }
  func.func @transform_1(%arg0: i32) -> (i32, i32) {
    %c0_i32 = arith.constant 0 : i32
    %c0_i32_0 = arith.constant 0 : i32
    %c0_i32_1 = arith.constant 0 : i32
    return %c0_i32, %c0_i32_0 : i32, i32
  }
  func.func @transform_2(%arg0: i32) -> (i32, i32) {
    %c0_i32 = arith.constant 0 : i32
    %c0_i32_0 = arith.constant 0 : i32
    %c0_i32_1 = arith.constant 0 : i32
    return %c0_i32, %c0_i32_0 : i32, i32
  }
  func.func @transform_3(%arg0: i32) -> (i32, i32) {
    %c0_i32 = arith.constant 0 : i32
    %c0_i32_0 = arith.constant 0 : i32
    %c0_i32_1 = arith.constant 0 : i32
    return %c0_i32, %c0_i32_0 : i32, i32
  }
  func.func @transform_4(%arg0: i32) -> (i32, i32) {
    %c0_i32 = arith.constant 0 : i32
    %c0_i32_0 = arith.constant 0 : i32
    %c0_i32_1 = arith.constant 0 : i32
    return %c0_i32, %c0_i32_0 : i32, i32
  }
  func.func @transform_5(%arg0: i32) -> (i32, i32) {
    %c0_i32 = arith.constant 0 : i32
    %c0_i32_0 = arith.constant 0 : i32
    return %arg0, %c0_i32 : i32, i32
  }
}

</mosaic_0001>

<llo_original>
// kernel: tpu_custom_call.1
$region0: #{tpu_custom_call.1}
  #allocation0 [shape = 'u32[]', space=smem, size = 0x4, offset = 0x4, fixed_abs, tag = 'smem constant byte address 0x4 - core index']
  #allocation1 [shape = 'u32[72,128]{1,0:T(1,128)}', space=vmem, size = 0x9000, scoped, tag = 'internal scratch']
  %s0 = inlined_call_operand.vmem [shape: bf16[16,32], index: 0, kind: input, shape index: {}]
  %s1 = inlined_call_operand.vmem [shape: bf16[32,64], index: 1, kind: input, shape index: {}]
  %s2 = inlined_call_operand.vmem [shape: f32[1,64], index: 2, kind: input, shape index: {}]
  %s3 = inlined_call_operand.vmem [shape: bf16[64,32], index: 3, kind: input, shape index: {}]
  %s4 = inlined_call_operand.vmem [shape: f32[1,32], index: 4, kind: input, shape index: {}]
  %s5 = inlined_call_operand.hbm [shape: bf16[16,32], index: 5, kind: output, shape index: {}]
  %s6 = sld [smem:[#allocation0]]
  $region30: #{tpu_custom_call.1} parent=0
    _
  %s8 = ssub.s32 1, %s6
  %s9 = scalar_select 0, %s8, %s6
  $region1: #{tpu_custom_call.1} parent=0
    #allocation2 [shape = 'u8[4096]{0}', space=vmem, size = 0x1000, scoped, tag = 'output window, operand 0, single buffered']
    #allocation3 [shape = 's32[1]{0}', space=sflag, size = 0x4, scoped, tag = 'scoped memory for tpu_custom_call.1']
    %10 = vsyncpa [#allocation3], 0
    // Predicated region
    $region2: #{tpu_custom_call.1} parent=1 // pred_check
      _
    $region3: #{tpu_custom_call.1} parent=1 // pred_check_branch
      %12 = sbr.rel (0) target = $region5
    $region4: #{tpu_custom_call.1} parent=1 // pred_region
      _
    $region5: #{tpu_custom_call.1} parent=1 // pred_fallthru
      _
    // Predicated region
    $region6: #{tpu_custom_call.1} parent=1 // pred_check
      _
    $region7: #{tpu_custom_call.1} parent=1 // pred_check_branch
      %14 = sbr.rel (0) target = $region9
    $region8: #{tpu_custom_call.1} parent=1 // pred_region
      _
    $region9: #{tpu_custom_call.1} parent=1 // pred_fallthru
      _
    // Predicated region
    $region10: #{tpu_custom_call.1} parent=1 // pred_check
      _
    $region11: #{tpu_custom_call.1} parent=1 // pred_check_branch
      %16 = sbr.rel (0) target = $region13
    $region12: #{tpu_custom_call.1} parent=1 // pred_region
      _
    $region13: #{tpu_custom_call.1} parent=1 // pred_fallthru
      _
    // Predicated region
    $region14: #{tpu_custom_call.1} parent=1 // pred_check
      _
    $region15: #{tpu_custom_call.1} parent=1 // pred_check_branch
      %18 = sbr.rel (0) target = $region17
    $region16: #{tpu_custom_call.1} parent=1 // pred_region
      _
    $region17: #{tpu_custom_call.1} parent=1 // pred_fallthru
      _
    // Predicated region
    $region18: #{tpu_custom_call.1} parent=1 // pred_check
      _
    $region19: #{tpu_custom_call.1} parent=1 // pred_check_branch
      %20 = sbr.rel (0) target = $region21
    $region20: #{tpu_custom_call.1} parent=1 // pred_region
      _
    $region21: #{tpu_custom_call.1} parent=1 // pred_fallthru
      _
    %v22 = vld [vmem:[%s0] sm:$0xf]
    %v23 = vld [vmem:[%s0 + $0x4] sm:$0xf]
    %v24 = vld [vmem:[%s1] sm:$0xf]
    %v25 = vld [vmem:[%s1 + $0x4] sm:$0xf]
    %v26 = vld [vmem:[%s1 + $0x8] sm:$0xf]
    %v27 = vld [vmem:[%s1 + $0xc] sm:$0xf]
    %v28 = vld [vmem:[%s2] sm:$0x1]
    %v30 = vperm.slane %v28, 0
    %v34 = vunpack.c.l.b16 %v22
    %v35 = vunpack.c.l.b16 %v23
    %v36 = vpack.c.b16 %v35, %v34
    %v41 = vunpack.c.l.b16 %v24
    %v42 = vunpack.c.l.b16 %v25
    %v43 = vunpack.c.l.b16 %v26
    %v44 = vunpack.c.l.b16 %v27
    %v45 = vpack.c.b16 %v42, %v41
    %v46 = vpack.c.b16 %v44, %v43
    %vm49 = vcmask 261120
    %v51 = vsel %vm49, %v36, 0
    %53 = vmatpush.bf16.msra.mxu0 0
    %54 = vmatpush.bf16.msra.mxu0 0
    %55 = vmatpush.bf16.msra.mxu0 0
    %56 = vmatpush.bf16.msra.mxu0 0
    %57 = vmatpush.bf16.msra.mxu0 0
    %58 = vmatpush.bf16.msra.mxu0 0
    %59 = vmatpush.bf16.msra.mxu0 %v46
    %60 = vmatpush.bf16.msra.mxu0 %v45
    %61 = vmatmul.bf16.gmra.mxu0 %v51
    %v62 = vpop.f32.mrf.mxu0
    %v63 = vadd.f32 %v30, %v62
    %v64 = vpop.f32.mrf.mxu0
    %v65 = vadd.f32 %v30, %v64
    %66 = vdwg.mxu0
    %v67 = vmul.f32 %v63, %v63
    %v68 = vmul.f32 %v65, %v65
    %v69 = vmul.f32 %v63, %v67
    %v70 = vmul.f32 %v65, %v68
    %v71 = vmul.f32 %v69, 0.044715
    %v72 = vmul.f32 %v70, 0.044715
    %v73 = vadd.f32 %v63, %v71
    %v74 = vadd.f32 %v65, %v72
    %v75 = vmul.f32 %v73, 0.7978846
    %v76 = vmul.f32 %v74, 0.7978846
    %v77 = vtanh.pop %v75
    %v78 = vtanh.pop %v76
    %v79 = vadd.f32 %v77, 1.0
    %v80 = vadd.f32 %v78, 1.0
    %v81 = vmul.f32 %v79, 0.5
    %v82 = vmul.f32 %v80, 0.5
    %v83 = vmul.f32 %v63, %v81
    %v84 = vmul.f32 %v65, %v82
    %v85 = vpack.c.bf16 %v84, %v83
    %v86 = vld [vmem:[%s3] sm:$0xf]
    %v87 = vld [vmem:[%s3 + $0x4] sm:$0xf]
    %v88 = vld [vmem:[%s3 + $0x8] sm:$0xf]
    %v89 = vld [vmem:[%s3 + $0xc] sm:$0xf]
    %v90 = vld [vmem:[%s3 + $0x10] sm:$0xf]
    %v91 = vld [vmem:[%s3 + $0x14] sm:$0xf]
    %v92 = vld [vmem:[%s3 + $0x18] sm:$0xf]
    %v93 = vld [vmem:[%s3 + $0x1c] sm:$0xf]
    %v94 = vld [vmem:[%s4] sm:$0x1]
    %v96 = vperm.slane %v94, 0
    %v106 = vunpack.c.l.b16 %v86
    %v107 = vunpack.c.l.b16 %v87
    %v108 = vunpack.c.l.b16 %v88
    %v109 = vunpack.c.l.b16 %v89
    %v110 = vunpack.c.l.b16 %v90
    %v111 = vunpack.c.l.b16 %v91
    %v112 = vunpack.c.l.b16 %v92
    %v113 = vunpack.c.l.b16 %v93
    %v114 = vpack.c.b16 %v107, %v106
    %v115 = vpack.c.b16 %v109, %v108
    %v116 = vpack.c.b16 %v111, %v110
    %v117 = vpack.c.b16 %v113, %v112
    %vm122 = vcmask 523264
    %v124 = vsel %vm122, %v85, 0
    %126 = vmatpush.bf16.msra.mxu0 0
    %127 = vmatpush.bf16.msra.mxu0 0
    %128 = vmatpush.bf16.msra.mxu0 0
    %129 = vmatpush.bf16.msra.mxu0 0
    %130 = vmatpush.bf16.msra.mxu0 %v117
    %131 = vmatpush.bf16.msra.mxu0 %v116
    %132 = vmatpush.bf16.msra.mxu0 %v115
    %133 = vmatpush.bf16.msra.mxu0 %v114
    %134 = vmatmul.bf16.gmra.mxu0 %v124
    %v135 = vpop.f32.mrf.mxu0
    %v136 = vadd.f32 %v96, %v135
    %v137 = vpop.f32.mrf.mxu0
    %v138 = vadd.f32 %v96, %v137
    %139 = vdwg.mxu0
    %v140 = vpack.c.bf16 %v136, %v136
    %v141 = vpack.c.bf16 %v138, %v138
    %vm142 = vcmask 257024
    %143 = vst.msk [vmem:[#allocation2] sm:$0xf] %vm142, %v140
    %144 = vst.msk [vmem:[#allocation2 + $0x4] sm:$0xf] %vm142, %v141
    // Predicated region
    $region22: #{tpu_custom_call.1} parent=1 // pred_check
      _
    $region23: #{tpu_custom_call.1} parent=1 // pred_check_branch
      %146 = sbr.rel (0) target = $region25
    $region24: #{tpu_custom_call.1} parent=1 // pred_region
      %148 = vsyncadd [#allocation3], 0
      %s149 = sshll.u32 [#allocation2], 4
      %s150 = int_to_ptr.vmem [resolvable:$true] %s149
      %s151 = sshll.u32 %s5, 4
      %s152 = int_to_ptr.hbm [resolvable:$true] %s151
      %157 = dma.vmem_to_hbm [thread:$0]  %s150, 128, %s152, [#allocation3], 64, 64, 4
    $region25: #{tpu_custom_call.1} parent=1 // pred_fallthru
      _
    // Predicated region
    $region26: #{tpu_custom_call.1} parent=1 // pred_check
      _
    $region27: #{tpu_custom_call.1} parent=1 // pred_check_branch
      %159 = sbr.rel (0) target = $region29
    $region28: #{tpu_custom_call.1} parent=1 // pred_region
      %161 = dma.done [#allocation3], 128
    $region29: #{tpu_custom_call.1} parent=1 // pred_fallthru
      _
    %162 = vsyncpa [#allocation3], 1

// kernel: tpu_custom_call.1
$region0: #{tpu_custom_call.1}
  #allocation0 [shape = 'u32[]', space=smem, size = 0x4, offset = 0x4, fixed_abs, tag = 'smem constant byte address 0x4 - core index']
  #allocation1 [shape = 'u32[72,128]{1,0:T(1,128)}', space=vmem, size = 0x9000, scoped, tag = 'internal scratch']
  %s0 = inlined_call_operand.vmem [shape: bf16[16,32], index: 0, kind: input, shape index: {}]
  %s1 = inlined_call_operand.vmem [shape: bf16[32,64], index: 1, kind: input, shape index: {}]
  %s2 = inlined_call_operand.vmem [shape: f32[1,64], index: 2, kind: input, shape index: {}]
  %s3 = inlined_call_operand.vmem [shape: bf16[64,32], index: 3, kind: input, shape index: {}]
  %s4 = inlined_call_operand.vmem [shape: f32[1,32], index: 4, kind: input, shape index: {}]
  %s5 = inlined_call_operand.hbm [shape: bf16[16,32], index: 5, kind: output, shape index: {}]
  %s6 = sld [smem:[#allocation0]]
  $region30: #{tpu_custom_call.1} parent=0
    _
  %s8 = ssub.s32 1, %s6
  %s9 = scalar_select 0, %s8, %s6
  $region1: #{tpu_custom_call.1} parent=0
    #allocation2 [shape = 'u8[4096]{0}', space=vmem, size = 0x1000, scoped, tag = 'output window, operand 0, single buffered']
    #allocation3 [shape = 's32[1]{0}', space=sflag, size = 0x4, scoped, tag = 'scoped memory for tpu_custom_call.1']
    %10 = vsyncpa [#allocation3], 0
    // Predicated region
    $region2: #{tpu_custom_call.1} parent=1 // pred_check
      _
    $region3: #{tpu_custom_call.1} parent=1 // pred_check_branch
      %12 = sbr.rel (0) target = $region5
    $region4: #{tpu_custom_call.1} parent=1 // pred_region
      _
    $region5: #{tpu_custom_call.1} parent=1 // pred_fallthru
      _
    // Predicated region
    $region6: #{tpu_custom_call.1} parent=1 // pred_check
      _
    $region7: #{tpu_custom_call.1} parent=1 // pred_check_branch
      %14 = sbr.rel (0) target = $region9
    $region8: #{tpu_custom_call.1} parent=1 // pred_region
      _
    $region9: #{tpu_custom_call.1} parent=1 // pred_fallthru
      _
    // Predicated region
    $region10: #{tpu_custom_call.1} parent=1 // pred_check
      _
    $region11: #{tpu_custom_call.1} parent=1 // pred_check_branch
      %16 = sbr.rel (0) target = $region13
    $region12: #{tpu_custom_call.1} parent=1 // pred_region
      _
    $region13: #{tpu_custom_call.1} parent=1 // pred_fallthru
      _
    // Predicated region
    $region14: #{tpu_custom_call.1} parent=1 // pred_check
      _
    $region15: #{tpu_custom_call.1} parent=1 // pred_check_branch
      %18 = sbr.rel (0) target = $region17
    $region16: #{tpu_custom_call.1} parent=1 // pred_region
      _
    $region17: #{tpu_custom_call.1} parent=1 // pred_fallthru
      _
    // Predicated region
    $region18: #{tpu_custom_call.1} parent=1 // pred_check
      _
    $region19: #{tpu_custom_call.1} parent=1 // pred_check_branch
      %20 = sbr.rel (0) target = $region21
    $region20: #{tpu_custom_call.1} parent=1 // pred_region
      _
    $region21: #{tpu_custom_call.1} parent=1 // pred_fallthru
      _
    %v22 = vld [vmem:[%s0] sm:$0xf]
    %v23 = vld [vmem:[%s0 + $0x4] sm:$0xf]
    %v24 = vld [vmem:[%s1] sm:$0xf]
    %v25 = vld [vmem:[%s1 + $0x4] sm:$0xf]
    %v26 = vld [vmem:[%s1 + $0x8] sm:$0xf]
    %v27 = vld [vmem:[%s1 + $0xc] sm:$0xf]
    %v28 = vld [vmem:[%s2] sm:$0x1]
    %v30 = vperm.slane %v28, 0
    %v34 = vunpack.c.l.b16 %v22
    %v35 = vunpack.c.l.b16 %v23
    %v36 = vpack.c.b16 %v35, %v34
    %v41 = vunpack.c.l.b16 %v24
    %v42 = vunpack.c.l.b16 %v25
    %v43 = vunpack.c.l.b16 %v26
    %v44 = vunpack.c.l.b16 %v27
    %v45 = vpack.c.b16 %v42, %v41
    %v46 = vpack.c.b16 %v44, %v43
    %vm49 = vcmask 261120
    %v51 = vsel %vm49, %v36, 0
    %53 = vmatpush.bf16.msra.mxu0 0
    %54 = vmatpush.bf16.msra.mxu0 0
    %55 = vmatpush.bf16.msra.mxu0 0
    %56 = vmatpush.bf16.msra.mxu0 0
    %57 = vmatpush.bf16.msra.mxu0 0
    %58 = vmatpush.bf16.msra.mxu0 0
    %59 = vmatpush.bf16.msra.mxu0 %v46
    %60 = vmatpush.bf16.msra.mxu0 %v45
    %61 = vmatmul.bf16.gmra.mxu0 %v51
    %v62 = vpop.f32.mrf.mxu0
    %v63 = vadd.f32 %v30, %v62
    %v64 = vpop.f32.mrf.mxu0
    %v65 = vadd.f32 %v30, %v64
    %66 = vdwg.mxu0
    %v67 = vmul.f32 %v63, %v63
    %v68 = vmul.f32 %v65, %v65
    %v69 = vmul.f32 %v63, %v67
    %v70 = vmul.f32 %v65, %v68
    %v71 = vmul.f32 %v69, 0.044715
    %v72 = vmul.f32 %v70, 0.044715
    %v73 = vadd.f32 %v63, %v71
    %v74 = vadd.f32 %v65, %v72
    %v75 = vmul.f32 %v73, 0.7978846
    %v76 = vmul.f32 %v74, 0.7978846
    %v77 = vtanh.pop %v75
    %v78 = vtanh.pop %v76
    %v79 = vadd.f32 %v77, 1.0
    %v80 = vadd.f32 %v78, 1.0
    %v81 = vmul.f32 %v79, 0.5
    %v82 = vmul.f32 %v80, 0.5
    %v83 = vmul.f32 %v63, %v81
    %v84 = vmul.f32 %v65, %v82
    %v85 = vpack.c.bf16 %v84, %v83
    %v86 = vld [vmem:[%s3] sm:$0xf]
    %v87 = vld [vmem:[%s3 + $0x4] sm:$0xf]
    %v88 = vld [vmem:[%s3 + $0x8] sm:$0xf]
    %v89 = vld [vmem:[%s3 + $0xc] sm:$0xf]
    %v90 = vld [vmem:[%s3 + $0x10] sm:$0xf]
    %v91 = vld [vmem:[%s3 + $0x14] sm:$0xf]
    %v92 = vld [vmem:[%s3 + $0x18] sm:$0xf]
    %v93 = vld [vmem:[%s3 + $0x1c] sm:$0xf]
    %v94 = vld [vmem:[%s4] sm:$0x1]
    %v96 = vperm.slane %v94, 0
    %v106 = vunpack.c.l.b16 %v86
    %v107 = vunpack.c.l.b16 %v87
    %v108 = vunpack.c.l.b16 %v88
    %v109 = vunpack.c.l.b16 %v89
    %v110 = vunpack.c.l.b16 %v90
    %v111 = vunpack.c.l.b16 %v91
    %v112 = vunpack.c.l.b16 %v92
    %v113 = vunpack.c.l.b16 %v93
    %v114 = vpack.c.b16 %v107, %v106
    %v115 = vpack.c.b16 %v109, %v108
    %v116 = vpack.c.b16 %v111, %v110
    %v117 = vpack.c.b16 %v113, %v112
    %vm122 = vcmask 523264
    %v124 = vsel %vm122, %v85, 0
    %126 = vmatpush.bf16.msra.mxu0 0
    %127 = vmatpush.bf16.msra.mxu0 0
    %128 = vmatpush.bf16.msra.mxu0 0
    %129 = vmatpush.bf16.msra.mxu0 0
    %130 = vmatpush.bf16.msra.mxu0 %v117
    %131 = vmatpush.bf16.msra.mxu0 %v116
    %132 = vmatpush.bf16.msra.mxu0 %v115
    %133 = vmatpush.bf16.msra.mxu0 %v114
    %134 = vmatmul.bf16.gmra.mxu0 %v124
    %v135 = vpop.f32.mrf.mxu0
    %v136 = vadd.f32 %v96, %v135
    %v137 = vpop.f32.mrf.mxu0
    %v138 = vadd.f32 %v96, %v137
    %139 = vdwg.mxu0
    %v140 = vpack.c.bf16 %v136, %v136
    %v141 = vpack.c.bf16 %v138, %v138
    %vm142 = vcmask 257024
    %143 = vst.msk [vmem:[#allocation2] sm:$0xf] %vm142, %v140
    %144 = vst.msk [vmem:[#allocation2 + $0x4] sm:$0xf] %vm142, %v141
    // Predicated region
    $region22: #{tpu_custom_call.1} parent=1 // pred_check
      _
    $region23: #{tpu_custom_call.1} parent=1 // pred_check_branch
      %146 = sbr.rel (0) target = $region25
    $region24: #{tpu_custom_call.1} parent=1 // pred_region
      %148 = vsyncadd [#allocation3], 0
      %s149 = sshll.u32 [#allocation2], 4
      %s150 = int_to_ptr.vmem [resolvable:$true] %s149
      %s151 = sshll.u32 %s5, 4
      %s152 = int_to_ptr.hbm [resolvable:$true] %s151
      %157 = dma.vmem_to_hbm [thread:$0]  %s150, 128, %s152, [#allocation3], 64, 64, 4
    $region25: #{tpu_custom_call.1} parent=1 // pred_fallthru
      _
    // Predicated region
    $region26: #{tpu_custom_call.1} parent=1 // pred_check
      _
    $region27: #{tpu_custom_call.1} parent=1 // pred_check_branch
      %159 = sbr.rel (0) target = $region29
    $region28: #{tpu_custom_call.1} parent=1 // pred_region
      %161 = dma.done [#allocation3], 128
    $region29: #{tpu_custom_call.1} parent=1 // pred_fallthru
      _
    %162 = vsyncpa [#allocation3], 1

</llo_original>
